<compile_context>
chip_gen: v5e
topology: v5e:2x2
jax: 0.10.0
libtpu: 0.0.40
codegen_flags: <defaults>
</compile_context>

<pallas_src>
import functools

import jax
import jax.numpy as jnp
from jax.experimental import pallas as pl
from jax.experimental.pallas import tpu as pltpu


# ---------------------------------------------------------------------------
# Pallas kernel: one (batch, pixel-tile) block of TM pixels.
#   g_ref    : (f_g, TM)    gating signal   (channels in sublanes, pixels in lanes)
#   x_ref    : (f_l, TM)    skip connection
#   wgt_ref  : (f_int, f_g) folded conv+BN weight for w_g (pre-transposed)
#   wxt_ref  : (f_int, f_l) folded conv+BN weight for w_x (pre-transposed)
#   bsum_ref : (f_int, 1)   folded bias bg + bx (pre-summed, f32)
#   wp_ref   : (f_int, 1)   folded conv+BN weight for psi (as a column, f32)
#   bp_ref   : (1, 1)       folded bias (f32)
#   o_ref    : (f_l, TM)    psi * x
# ---------------------------------------------------------------------------
def attention_block_kernel(g_ref, x_ref, wgt_ref, wxt_ref, bsum_ref, wp_ref,
                           bp_ref, o_ref, *, mat_dtype):
    g = g_ref[...]
    x = x_ref[...]

    # 1x1 convs as channel matmuls; operands in mat_dtype, f32 accumulation.
    g1 = jnp.dot(wgt_ref[...], g.astype(mat_dtype),
                 preferred_element_type=jnp.float32)
    x1 = jnp.dot(wxt_ref[...], x.astype(mat_dtype),
                 preferred_element_type=jnp.float32)

    a = jnp.maximum(g1 + x1 + bsum_ref[...], 0.0)                 # (f_int, TM)

    # psi conv has a single output channel: VPU multiply + sublane reduction
    # (XLU) -- keeps the (free) side units busy while the kernel is HBM-bound.
    s = jnp.sum(a * wp_ref[...], axis=0, keepdims=True) + bp_ref[...]  # (1, TM)
    psi = jax.nn.sigmoid(s)

    o_ref[...] = (psi * x).astype(o_ref.dtype)                    # gate the skip


def _fold_bn(w, b, gamma, beta, mean, var, eps=1e-5):
    """Fold inference-mode BatchNorm into a preceding 1x1 conv.

    w: (Cin, Cout), b: (Cout,). Returns folded (w', b')."""
    scale = gamma / jnp.sqrt(var + eps)          # (Cout,)
    w_f = w * scale[None, :]
    b_f = b * scale + beta - mean * scale
    return w_f, b_f


def _const_block_spec(shape):
    """BlockSpec for a grid-invariant (weight/bias) operand.

    Single-buffered: the block is never refetched, so the default second
    pipeline buffer is pure VMEM waste (matters on v7x's 64 MiB VMEM).
    Falls back to a plain BlockSpec on jax versions without pipeline_mode."""
    idx = lambda n, p: (0, 0)
    try:
        return pl.BlockSpec(shape, idx, pipeline_mode=pl.Buffered(1))
    except (TypeError, ValueError):
        return pl.BlockSpec(shape, idx)


def _choose_pixel_tile(HW, N, f_g, f_l, f_int, act_itemsize, tm_cap,
                       act_vmem_budget):
    """Channel/dtype-aware pixel-tile size (multiple of 128 lanes)."""
    if HW <= 128:
        return HW  # single block spanning the full (small) spatial extent
    # Per-pixel VMEM bytes: double-buffered g/x/out tiles + f32 intermediates.
    per_pixel = 2 * act_itemsize * (f_g + 2 * f_l) + 4 * (f_int + 2)
    tm = act_vmem_budget // per_pixel
    tm = min(tm, tm_cap, (HW // 128) * 128)
    tm = max(128, (tm // 128) * 128)
    # v7x has 2 TensorCores and shards "parallel" grid axes across them:
    # make sure there are at least 2 grid steps when the spatial size allows.
    while N * (-(-HW // tm)) < 2 and tm > 128:
        tm = max(128, ((tm // 2) // 128) * 128)
    return tm


@functools.partial(jax.jit, static_argnames=("tm_cap", "compute_dtype"))
def attention_block(g, x, params, tm_cap=8192, compute_dtype=None):
    """g, x: NCHW float arrays (f32 or bf16; output dtype follows x.dtype).

    compute_dtype: optional dtype for the matmul operands (e.g. jnp.bfloat16
    on v5e to avoid f32-MXU passes even when HBM I/O stays f32).  Default
    None keeps the activation dtype.  Accumulation is always f32."""
    N, f_g, H, W = g.shape
    _, f_l, _, _ = x.shape
    f_int = params["wg"].shape[1]
    HW = H * W

    # Fold BN into the 1x1 convs (plain-JAX glue on tiny tensors).
    wg, bg = _fold_bn(params["wg"], params["bg"],
                      params["bn_g_gamma"], params["bn_g_beta"],
                      params["bn_g_mean"], params["bn_g_var"])
    wx, bx = _fold_bn(params["wx"], params["bx"],
                      params["bn_x_gamma"], params["bn_x_beta"],
                      params["bn_x_mean"], params["bn_x_var"])
    wp, bp = _fold_bn(params["wp"], params["bp"],
                      params["bn_p_gamma"], params["bn_p_beta"],
                      params["bn_p_mean"], params["bn_p_var"])

    mat_dtype = jnp.dtype(compute_dtype) if compute_dtype is not None else g.dtype

    # Pre-transpose / pre-fold weights for the pixels-in-lanes layout.
    wgt = jnp.transpose(wg).astype(mat_dtype)        # (f_int, f_g)
    wxt = jnp.transpose(wx).astype(mat_dtype)        # (f_int, f_l)
    bsum = (bg + bx).reshape(f_int, 1).astype(jnp.float32)
    wp2 = wp.reshape(f_int, 1).astype(jnp.float32)
    bp2 = bp.reshape(1, 1).astype(jnp.float32)

    # NCHW consumed directly: (N, C, H, W) -> (N, C, H*W) is a free reshape.
    g3 = g.reshape(N, f_g, HW)
    x3 = x.reshape(N, f_l, HW)

    act_itemsize = max(g.dtype.itemsize, x.dtype.itemsize)
    tm_eff = _choose_pixel_tile(HW, N, f_g, f_l, f_int, act_itemsize, tm_cap,
                                act_vmem_budget=24 * 1024 * 1024)
    n_tiles = pl.cdiv(HW, tm_eff)
    grid = (N, n_tiles)

    out_itemsize = x.dtype.itemsize
    cost = pl.CostEstimate(
        flops=2 * N * HW * f_int * (f_g + f_l) + 4 * N * HW * f_int,
        transcendentals=N * HW,
        bytes_accessed=N * HW * (f_g * g.dtype.itemsize
                                 + f_l * x.dtype.itemsize
                                 + f_l * out_itemsize),
    )

    out3 = pl.pallas_call(
        functools.partial(attention_block_kernel, mat_dtype=mat_dtype),
        out_shape=jax.ShapeDtypeStruct((N, f_l, HW), x.dtype),
        grid_spec=pltpu.PrefetchScalarGridSpec(
            num_scalar_prefetch=0,
            grid=grid,
            in_specs=[
                pl.BlockSpec((None, f_g, tm_eff), lambda n, p: (n, 0, p)),  # g tile
                pl.BlockSpec((None, f_l, tm_eff), lambda n, p: (n, 0, p)),  # x tile
                _const_block_spec((f_int, f_g)),                            # wg^T
                _const_block_spec((f_int, f_l)),                            # wx^T
                _const_block_spec((f_int, 1)),                              # bg+bx
                _const_block_spec((f_int, 1)),                              # wp
                _const_block_spec((1, 1)),                                  # bp
            ],
            out_specs=pl.BlockSpec((None, f_l, tm_eff), lambda n, p: (n, 0, p)),
        ),
        compiler_params=pltpu.CompilerParams(
            dimension_semantics=("parallel", "parallel"),
            vmem_limit_bytes=40 * 1024 * 1024),
        cost_estimate=cost,
    )(g3, x3, wgt, wxt, bsum, wp2, bp2)

    return out3.reshape(N, f_l, H, W)


# ---------------------------------------------------------------------------
# Pure-JAX reference (same math) for a correctness check.
# ---------------------------------------------------------------------------
def attention_block_ref(g, x, params):
    wg, bg = _fold_bn(params["wg"], params["bg"],
                      params["bn_g_gamma"], params["bn_g_beta"],
                      params["bn_g_mean"], params["bn_g_var"])
    wx, bx = _fold_bn(params["wx"], params["bx"],
                      params["bn_x_gamma"], params["bn_x_beta"],
                      params["bn_x_mean"], params["bn_x_var"])
    wp, bp = _fold_bn(params["wp"], params["bp"],
                      params["bn_p_gamma"], params["bn_p_beta"],
                      params["bn_p_mean"], params["bn_p_var"])
    g_nhwc = jnp.transpose(g, (0, 2, 3, 1))
    x_nhwc = jnp.transpose(x, (0, 2, 3, 1))
    g1 = jnp.einsum("nhwc,cd->nhwd", g_nhwc, wg) + bg
    x1 = jnp.einsum("nhwc,cd->nhwd", x_nhwc, wx) + bx
    a = jnp.maximum(g1 + x1, 0.0)
    psi = jax.nn.sigmoid(jnp.einsum("nhwd,do->nhwo", a, wp) + bp)
    out = psi * x_nhwc
    return jnp.transpose(out, (0, 3, 1, 2))


def init_params(key, f_g, f_l, f_int):
    ks = jax.random.split(key, 12)
    p = {
        # 1x1 conv weights stored as (Cin, Cout), biases (Cout,)
        "wg": jax.random.normal(ks[0], (f_g, f_int), jnp.float32) * 0.1,
        "bg": jax.random.normal(ks[1], (f_int,), jnp.float32) * 0.1,
        "wx": jax.random.normal(ks[2], (f_l, f_int), jnp.float32) * 0.1,
        "bx": jax.random.normal(ks[3], (f_int,), jnp.float32) * 0.1,
        "wp": jax.random.normal(ks[4], (f_int, 1), jnp.float32) * 0.1,
        "bp": jax.random.normal(ks[5], (1,), jnp.float32) * 0.1,
        # BatchNorm (inference) params / running stats
        "bn_g_gamma": 1.0 + 0.1 * jax.random.normal(ks[6], (f_int,), jnp.float32),
        "bn_g_beta": 0.1 * jax.random.normal(ks[7], (f_int,), jnp.float32),
        "bn_g_mean": 0.1 * jax.random.normal(ks[8], (f_int,), jnp.float32),
        "bn_g_var": jnp.abs(jax.random.normal(ks[9], (f_int,), jnp.float32)) + 0.5,
        "bn_x_gamma": jnp.ones((f_int,), jnp.float32),
        "bn_x_beta": jnp.zeros((f_int,), jnp.float32),
        "bn_x_mean": jnp.zeros((f_int,), jnp.float32),
        "bn_x_var": jnp.ones((f_int,), jnp.float32),
        "bn_p_gamma": jnp.ones((1,), jnp.float32),
        "bn_p_beta": jnp.zeros((1,), jnp.float32),
        "bn_p_mean": 0.1 * jax.random.normal(ks[10], (1,), jnp.float32),
        "bn_p_var": jnp.abs(jax.random.normal(ks[11], (1,), jnp.float32)) + 0.5,
    }
    return p


if __name__ == "__main__":
    key = jax.random.PRNGKey(0)
    k_g, k_x, k_p = jax.random.split(key, 3)

    # Main check: f32 end-to-end, HW a multiple of 128 (exact tiles).
    N, f_g, f_l, f_int, H, W = 2, 8, 8, 4, 16, 16
    g = jax.random.normal(k_g, (N, f_g, H, W), jnp.float32)
    x = jax.random.normal(k_x, (N, f_l, H, W), jnp.float32)
    params = init_params(k_p, f_g, f_l, f_int)

    out = jax.block_until_ready(attention_block(g, x, params))
    ref = attention_block_ref(g, x, params)
    assert out.shape == (N, f_l, H, W)
    assert jnp.allclose(out, ref, atol=1e-5, rtol=1e-5), "mismatch vs reference (f32)"

    # bf16 activations/output end-to-end (halves HBM traffic; f32 accumulation).
    g_bf = g.astype(jnp.bfloat16)
    x_bf = x.astype(jnp.bfloat16)
    out_bf = jax.block_until_ready(attention_block(g_bf, x_bf, params))
    assert out_bf.dtype == jnp.bfloat16
    ref_bf = attention_block_ref(g_bf.astype(jnp.float32),
                                 x_bf.astype(jnp.float32), params)
    assert jnp.allclose(out_bf.astype(jnp.float32), ref_bf,
                        atol=5e-2, rtol=5e-2), "mismatch vs reference (bf16)"

    # f32 I/O with bf16 matmul operands (the v5e deep-layer path).
    out_mx = jax.block_until_ready(
        attention_block(g, x, params, compute_dtype=jnp.bfloat16))
    assert jnp.allclose(out_mx, ref, atol=5e-2, rtol=5e-2), \
        "mismatch vs reference (bf16 matmul operands)"

    # Ragged spatial size, HW < 128 (single full-extent block, no padding pass).
    H2, W2 = 10, 10
    g2 = jax.random.normal(k_g, (N, f_g, H2, W2), jnp.float32)
    x2 = jax.random.normal(k_x, (N, f_l, H2, W2), jnp.float32)
    out2 = jax.block_until_ready(attention_block(g2, x2, params))
    ref2 = attention_block_ref(g2, x2, params)
    assert out2.shape == (N, f_l, H2, W2)
    assert jnp.allclose(out2, ref2, atol=1e-5, rtol=1e-5), \
        "mismatch vs reference (HW < 128)"

    # Ragged spatial size with a partial last lane-tile (HW=180, tile=128):
    # exercises Pallas' masked boundary-block load/store (no pad/slice pass).
    H3, W3 = 12, 15
    g3_in = jax.random.normal(k_g, (N, f_g, H3, W3), jnp.float32)
    x3_in = jax.random.normal(k_x, (N, f_l, H3, W3), jnp.float32)
    out3 = jax.block_until_ready(attention_block(g3_in, x3_in, params))
    ref3 = attention_block_ref(g3_in, x3_in, params)
    assert out3.shape == (N, f_l, H3, W3)
    assert jnp.allclose(out3, ref3, atol=1e-5, rtol=1e-5), \
        "mismatch vs reference (partial lane-tile)"

    print("KERNEL_OK")
</pallas_src>

<mosaic_0001>
module attributes {stable_mosaic.version = 11 : i64} {
  func.func @attention_block_kernel(%arg0: i32, %arg1: i32, %arg2: memref<1x8x256xf32, #tpu.memory_space<vmem>>, %arg3: memref<1x8x256xf32, #tpu.memory_space<vmem>>, %arg4: memref<4x8xf32, #tpu.memory_space<vmem>>, %arg5: memref<4x8xf32, #tpu.memory_space<vmem>>, %arg6: memref<4x1xf32, #tpu.memory_space<vmem>>, %arg7: memref<4x1xf32, #tpu.memory_space<vmem>>, %arg8: memref<1x1xf32, #tpu.memory_space<vmem>>, %arg9: memref<1x8x256xf32, #tpu.memory_space<vmem>>) attributes {dimension_semantics = [#tpu.dimension_semantics<parallel>, #tpu.dimension_semantics<parallel>], iteration_bounds = array<i64: 2, 1>, scalar_prefetch = 0 : i64, scratch_operands = 0 : i64, tpu.core_type = #tpu.core_type<tc>, window_params = [{transform_indices = @transform_0, window_bounds = array<i64: 1, 8, 256>}, {transform_indices = @transform_1, window_bounds = array<i64: 1, 8, 256>}, {pipeline_mode = #tpu.pipeline_mode<synchronous>, transform_indices = @transform_2, window_bounds = array<i64: 4, 8>}, {pipeline_mode = #tpu.pipeline_mode<synchronous>, transform_indices = @transform_3, window_bounds = array<i64: 4, 8>}, {pipeline_mode = #tpu.pipeline_mode<synchronous>, transform_indices = @transform_4, window_bounds = array<i64: 4, 1>}, {pipeline_mode = #tpu.pipeline_mode<synchronous>, transform_indices = @transform_5, window_bounds = array<i64: 4, 1>}, {pipeline_mode = #tpu.pipeline_mode<synchronous>, transform_indices = @transform_6, window_bounds = array<i64: 1, 1>}, {transform_indices = @transform_7, window_bounds = array<i64: 1, 8, 256>}]} {
    %c0 = arith.constant 0 : index
    %c0_0 = arith.constant 0 : index
    %c0_1 = arith.constant 0 : index
    %0 = vector.load %arg2[%c0, %c0_0, %c0_1] : memref<1x8x256xf32, #tpu.memory_space<vmem>>, vector<1x8x256xf32>
    %1 = vector.shape_cast %0 : vector<1x8x256xf32> to vector<8x256xf32>
    %c0_2 = arith.constant 0 : index
    %c0_3 = arith.constant 0 : index
    %c0_4 = arith.constant 0 : index
    %2 = vector.load %arg3[%c0_2, %c0_3, %c0_4] : memref<1x8x256xf32, #tpu.memory_space<vmem>>, vector<1x8x256xf32>
    %3 = vector.shape_cast %2 : vector<1x8x256xf32> to vector<8x256xf32>
    %c0_5 = arith.constant 0 : index
    %c0_6 = arith.constant 0 : index
    %4 = vector.load %arg4[%c0_5, %c0_6] : memref<4x8xf32, #tpu.memory_space<vmem>>, vector<4x8xf32>
    %cst = arith.constant dense<0.000000e+00> : vector<4x256xf32>
    %5 = tpu.matmul %4, %1, %cst {dimension_numbers = #tpu.dot_dimension_numbers<[1], [0], [0], [1], [0, 0, 1, 1], [], []>} : vector<4x8xf32>, vector<8x256xf32>, vector<4x256xf32> -> vector<4x256xf32>
    %c0_7 = arith.constant 0 : index
    %c0_8 = arith.constant 0 : index
    %6 = vector.load %arg5[%c0_7, %c0_8] : memref<4x8xf32, #tpu.memory_space<vmem>>, vector<4x8xf32>
    %cst_9 = arith.constant dense<0.000000e+00> : vector<4x256xf32>
    %7 = tpu.matmul %6, %3, %cst_9 {dimension_numbers = #tpu.dot_dimension_numbers<[1], [0], [0], [1], [0, 0, 1, 1], [], []>} : vector<4x8xf32>, vector<8x256xf32>, vector<4x256xf32> -> vector<4x256xf32>
    %8 = arith.addf %5, %7 : vector<4x256xf32>
    %c0_10 = arith.constant 0 : index
    %c0_11 = arith.constant 0 : index
    %9 = vector.load %arg6[%c0_10, %c0_11] : memref<4x1xf32, #tpu.memory_space<vmem>>, vector<4x1xf32>
    %10 = vector.broadcast %9 : vector<4x1xf32> to vector<4x256xf32>
    %11 = arith.addf %8, %10 : vector<4x256xf32>
    %cst_12 = arith.constant 0.000000e+00 : f32
    %12 = vector.broadcast %cst_12 : f32 to vector<4x256xf32>
    %13 = arith.maximumf %11, %12 : vector<4x256xf32>
    %c0_13 = arith.constant 0 : index
    %c0_14 = arith.constant 0 : index
    %14 = vector.load %arg7[%c0_13, %c0_14] : memref<4x1xf32, #tpu.memory_space<vmem>>, vector<4x1xf32>
    %15 = vector.broadcast %14 : vector<4x1xf32> to vector<4x256xf32>
    %16 = arith.mulf %13, %15 : vector<4x256xf32>
    %cst_15 = arith.constant dense<0.000000e+00> : vector<256xf32>
    %17 = vector.multi_reduction <add>, %16, %cst_15 [0] : vector<4x256xf32> to vector<256xf32>
    %18 = vector.shape_cast %17 : vector<256xf32> to vector<1x256xf32>
    %c0_16 = arith.constant 0 : index
    %c0_17 = arith.constant 0 : index
    %19 = vector.load %arg8[%c0_16, %c0_17] : memref<1x1xf32, #tpu.memory_space<vmem>>, vector<1x1xf32>
    %20 = vector.broadcast %19 : vector<1x1xf32> to vector<1x256xf32>
    %21 = arith.addf %18, %20 : vector<1x256xf32>
    %22 = arith.negf %21 : vector<1x256xf32>
    %23 = math.exp %22 : vector<1x256xf32>
    %cst_18 = arith.constant 1.000000e+00 : f32
    %24 = vector.broadcast %cst_18 : f32 to vector<1x256xf32>
    %25 = arith.addf %24, %23 : vector<1x256xf32>
    %26 = arith.divf %24, %25 : vector<1x256xf32>
    %27 = vector.broadcast %26 : vector<1x256xf32> to vector<8x256xf32>
    %28 = arith.mulf %27, %3 : vector<8x256xf32>
    %c0_19 = arith.constant 0 : index
    %c0_20 = arith.constant 0 : index
    %c0_21 = arith.constant 0 : index
    %29 = vector.load %arg9[%c0_19, %c0_20, %c0_21] : memref<1x8x256xf32, #tpu.memory_space<vmem>>, vector<1x8x256xf32>
    %30 = vector.shape_cast %29 : vector<1x8x256xf32> to vector<8x256xf32>
    %31 = vector.shape_cast %28 : vector<8x256xf32> to vector<1x8x256xf32>
    tpu.vector_store %arg9[%c0_19, %c0_20, %c0_21], %31 {strides = array<i32>} : memref<1x8x256xf32, #tpu.memory_space<vmem>>, vector<1x8x256xf32>,
    return
  }
  func.func @transform_0(%arg0: i32, %arg1: i32) -> (i32, i32, i32) {
    %c0_i32 = arith.constant 0 : i32
    %c0_i32_0 = arith.constant 0 : i32
    return %arg0, %c0_i32, %arg1 : i32, i32, i32
  }
  func.func @transform_1(%arg0: i32, %arg1: i32) -> (i32, i32, i32) {
    %c0_i32 = arith.constant 0 : i32
    %c0_i32_0 = arith.constant 0 : i32
    return %arg0, %c0_i32, %arg1 : i32, i32, i32
  }
  func.func @transform_2(%arg0: i32, %arg1: i32) -> (i32, i32) {
    %c0_i32 = arith.constant 0 : i32
    %c0_i32_0 = arith.constant 0 : i32
    %c0_i32_1 = arith.constant 0 : i32
    return %c0_i32, %c0_i32_0 : i32, i32
  }
  func.func @transform_3(%arg0: i32, %arg1: i32) -> (i32, i32) {
    %c0_i32 = arith.constant 0 : i32
    %c0_i32_0 = arith.constant 0 : i32
    %c0_i32_1 = arith.constant 0 : i32
    return %c0_i32, %c0_i32_0 : i32, i32
  }
  func.func @transform_4(%arg0: i32, %arg1: i32) -> (i32, i32) {
    %c0_i32 = arith.constant 0 : i32
    %c0_i32_0 = arith.constant 0 : i32
    %c0_i32_1 = arith.constant 0 : i32
    return %c0_i32, %c0_i32_0 : i32, i32
  }
  func.func @transform_5(%arg0: i32, %arg1: i32) -> (i32, i32) {
    %c0_i32 = arith.constant 0 : i32
    %c0_i32_0 = arith.constant 0 : i32
    %c0_i32_1 = arith.constant 0 : i32
    return %c0_i32, %c0_i32_0 : i32, i32
  }
  func.func @transform_6(%arg0: i32, %arg1: i32) -> (i32, i32) {
    %c0_i32 = arith.constant 0 : i32
    %c0_i32_0 = arith.constant 0 : i32
    %c0_i32_1 = arith.constant 0 : i32
    return %c0_i32, %c0_i32_0 : i32, i32
  }
  func.func @transform_7(%arg0: i32, %arg1: i32) -> (i32, i32, i32) {
    %c0_i32 = arith.constant 0 : i32
    %c0_i32_0 = arith.constant 0 : i32
    return %arg0, %c0_i32, %arg1 : i32, i32, i32
  }
}

</mosaic_0001>

<llo_original>
// kernel: attention_block.1
$region0: #{attention_block.1}
  #allocation0 [shape = 'u32[]', space=smem, size = 0x4, offset = 0x4, fixed_abs, tag = 'smem constant byte address 0x4 - core index']
  #allocation1 [shape = 'u32[72,128]{1,0:T(1,128)}', space=vmem, size = 0x9000, scoped, tag = 'internal scratch']
  #allocation2 [shape = 'f32[1,1]{1,0:T(1,128)S(1)}', space=vmem, size = 0x200, scoped, tag = 'scoped memory for attention_block.1']
  %s0 = inlined_call_operand.vmem [shape: f32[2,8,256], index: 0, kind: input, shape index: {}]
  %s1 = inlined_call_operand.vmem [shape: f32[2,8,256], index: 1, kind: input, shape index: {}]
  %s2 = inlined_call_operand.vmem [shape: f32[4,8], index: 2, kind: input, shape index: {}]
  %s3 = inlined_call_operand.vmem [shape: f32[4,8], index: 3, kind: input, shape index: {}]
  %s4 = inlined_call_operand.vmem [shape: f32[4,1], index: 4, kind: input, shape index: {}]
  %s5 = inlined_call_operand.vmem [shape: f32[4,1], index: 5, kind: input, shape index: {}]
  %s6 = inlined_call_operand.<no memory space> [shape: f32[1,1], index: 6, kind: input, shape index: {}]
  %s7 = inlined_call_operand.vmem [shape: f32[2,8,256], index: 7, kind: output, shape index: {}]
  %s8 = sld [smem:[#allocation0]]
  $region61: #{attention_block.1} parent=0
    _
  %s10 = ssub.s32 1, %s8
  %s11 = scalar_select 0, %s10, %s8
  %v12 = vstv %s6
  %13 = vst [vmem:[#allocation2] sm:$0x1] %v12
  loop: start=0, step=1, limit=4
  $region2: #{attention_block.1} parent=0 // loop_pre_header
    _
  $region3: #{attention_block.1} parent=0 // loop_header
    %s15 = sphi 0, %s19
    %p16 = scmp.ge.s32.totalorder %s15, 4
    %s22 = sphi 0, %s34
    %s23 = sphi 0, %s30
    %s24 = sphi 0, %s22
    %s25 = sphi 0, %s23
    %s26 = sphi 0, %s24
    %s27 = sphi 0, %s25
    %s39 = sphi 0, %s41
    %s42 = sphi 0, %s39
    %s43 = sphi 0, %s42
    %s59 = sphi 0, %s43
    %s67 = sphi 0, %s69
    %s70 = sphi 0, %s67
    %s71 = sphi 0, %s70
    %s87 = sphi 0, %s71
    %s91 = sphi 0, %s91
    %s93 = sphi 0, %s91
    %s94 = sphi 0, %s93
    %s108 = sphi 0, %s94
    %s112 = sphi 0, %s112
    %s114 = sphi 0, %s112
    %s115 = sphi 0, %s114
    %s129 = sphi 0, %s115
    %s133 = sphi 0, %s133
    %s135 = sphi 0, %s133
    %s136 = sphi 0, %s135
    %s150 = sphi 0, %s136
    %s154 = sphi 0, %s154
    %s156 = sphi 0, %s154
    %s157 = sphi 0, %s156
    %s171 = sphi 0, %s157
    %s175 = sphi 0, %s175
    %s177 = sphi 0, %s175
    %s178 = sphi 0, %s177
    %s192 = sphi 0, %s178
    %s200 = sphi 0, %s202
    %s203 = sphi 0, %s200
    %s204 = sphi 0, %s203
    %s220 = sphi 0, %s204
  $region4: #{attention_block.1} parent=0 // loop_header_branch
    %18 = sbr.rel (%p16) target = $region8
  $region5: #{attention_block.1} parent=0 // loop_body
    %s20 = ssub.s32 %s15, 1
    %s21 = ssub.s32 %s15, 2
    %s28 = sadd.s32 1, %s23
    %p29 = scmp.ge.s32.totalorder %s28, 1
    %s30 = scalar_select %p29, 0, %s28
    %s31 = sadd.s32 1, %s22
    %s32 = scalar_select %p29, %s31, %s22
    %p33 = scmp.ge.s32.totalorder %s32, 2
    %s34 = scalar_select %p33, 0, %s32
    %s35 = ssub.s32 %s22, %s34
    %s36 = ssub.s32 %s23, %s30
    %s37 = sor.u32 %s35, %s36
    %p38 = scmp.eq.s32.totalorder %s37, 0
    %s40 = sadd.s32 %s39, 1
    %s41 = scalar_select %p38, %s39, %s40
    %p44 = pneg %p38
    %p45 = scmp.eq.s32.totalorder %s15, 1
    %p46 = por %p44, %p45
    %p47 = scmp.ne.s32.totalorder %s39, %s42
    %p48 = scmp.eq.s32.totalorder %s15, 0
    %p49 = por %p47, %p48
    %p50 = scmp.ne.s32.totalorder %s39, %s42
    %p51 = scmp.eq.s32.totalorder %s20, 1
    %p52 = por %p50, %p51
    %p53 = scmp.ne.s32.totalorder %s42, %s43
    %p54 = scmp.eq.s32.totalorder %s20, 0
    %p55 = por %p53, %p54
    %p56 = scmp.ne.s32.totalorder %s42, %s43
    %p57 = scmp.eq.s32.totalorder %s21, 1
    %p58 = por %p56, %p57
    %p60 = scmp.ne.s32.totalorder %s43, %s59
    %p61 = scmp.eq.s32.totalorder %s21, 0
    %p62 = por %p60, %p61
    %s63 = ssub.s32 %s22, %s34
    %s64 = ssub.s32 %s23, %s30
    %s65 = sor.u32 %s63, %s64
    %p66 = scmp.eq.s32.totalorder %s65, 0
    %s68 = sadd.s32 %s67, 1
    %s69 = scalar_select %p66, %s67, %s68
    %p72 = pneg %p66
    %p73 = scmp.eq.s32.totalorder %s15, 1
    %p74 = por %p72, %p73
    %p75 = scmp.ne.s32.totalorder %s67, %s70
    %p76 = scmp.eq.s32.totalorder %s15, 0
    %p77 = por %p75, %p76
    %p78 = scmp.ne.s32.totalorder %s67, %s70
    %p79 = scmp.eq.s32.totalorder %s20, 1
    %p80 = por %p78, %p79
    %p81 = scmp.ne.s32.totalorder %s70, %s71
    %p82 = scmp.eq.s32.totalorder %s20, 0
    %p83 = por %p81, %p82
    %p84 = scmp.ne.s32.totalorder %s70, %s71
    %p85 = scmp.eq.s32.totalorder %s21, 1
    %p86 = por %p84, %p85
    %p88 = scmp.ne.s32.totalorder %s71, %s87
    %p89 = scmp.eq.s32.totalorder %s21, 0
    %p90 = por %p88, %p89
    %s92 = sadd.s32 %s91, 1
    %p95 = scmp.eq.s32.totalorder %s15, 1
    %p96 = scmp.ne.s32.totalorder %s91, %s93
    %p97 = scmp.eq.s32.totalorder %s15, 0
    %p98 = por %p96, %p97
    %p99 = scmp.ne.s32.totalorder %s91, %s93
    %p100 = scmp.eq.s32.totalorder %s20, 1
    %p101 = por %p99, %p100
    %p102 = scmp.ne.s32.totalorder %s93, %s94
    %p103 = scmp.eq.s32.totalorder %s20, 0
    %p104 = por %p102, %p103
    %p105 = scmp.ne.s32.totalorder %s93, %s94
    %p106 = scmp.eq.s32.totalorder %s21, 1
    %p107 = por %p105, %p106
    %p109 = scmp.ne.s32.totalorder %s94, %s108
    %p110 = scmp.eq.s32.totalorder %s21, 0
    %p111 = por %p109, %p110
    %s113 = sadd.s32 %s112, 1
    %p116 = scmp.eq.s32.totalorder %s15, 1
    %p117 = scmp.ne.s32.totalorder %s112, %s114
    %p118 = scmp.eq.s32.totalorder %s15, 0
    %p119 = por %p117, %p118
    %p120 = scmp.ne.s32.totalorder %s112, %s114
    %p121 = scmp.eq.s32.totalorder %s20, 1
    %p122 = por %p120, %p121
    %p123 = scmp.ne.s32.totalorder %s114, %s115
    %p124 = scmp.eq.s32.totalorder %s20, 0
    %p125 = por %p123, %p124
    %p126 = scmp.ne.s32.totalorder %s114, %s115
    %p127 = scmp.eq.s32.totalorder %s21, 1
    %p128 = por %p126, %p127
    %p130 = scmp.ne.s32.totalorder %s115, %s129
    %p131 = scmp.eq.s32.totalorder %s21, 0
    %p132 = por %p130, %p131
    %s134 = sadd.s32 %s133, 1
    %p137 = scmp.eq.s32.totalorder %s15, 1
    %p138 = scmp.ne.s32.totalorder %s133, %s135
    %p139 = scmp.eq.s32.totalorder %s15, 0
    %p140 = por %p138, %p139
    %p141 = scmp.ne.s32.totalorder %s133, %s135
    %p142 = scmp.eq.s32.totalorder %s20, 1
    %p143 = por %p141, %p142
    %p144 = scmp.ne.s32.totalorder %s135, %s136
    %p145 = scmp.eq.s32.totalorder %s20, 0
    %p146 = por %p144, %p145
    %p147 = scmp.ne.s32.totalorder %s135, %s136
    %p148 = scmp.eq.s32.totalorder %s21, 1
    %p149 = por %p147, %p148
    %p151 = scmp.ne.s32.totalorder %s136, %s150
    %p152 = scmp.eq.s32.totalorder %s21, 0
    %p153 = por %p151, %p152
    %s155 = sadd.s32 %s154, 1
    %p158 = scmp.eq.s32.totalorder %s15, 1
    %p159 = scmp.ne.s32.totalorder %s154, %s156
    %p160 = scmp.eq.s32.totalorder %s15, 0
    %p161 = por %p159, %p160
    %p162 = scmp.ne.s32.totalorder %s154, %s156
    %p163 = scmp.eq.s32.totalorder %s20, 1
    %p164 = por %p162, %p163
    %p165 = scmp.ne.s32.totalorder %s156, %s157
    %p166 = scmp.eq.s32.totalorder %s20, 0
    %p167 = por %p165, %p166
    %p168 = scmp.ne.s32.totalorder %s156, %s157
    %p169 = scmp.eq.s32.totalorder %s21, 1
    %p170 = por %p168, %p169
    %p172 = scmp.ne.s32.totalorder %s157, %s171
    %p173 = scmp.eq.s32.totalorder %s21, 0
    %p174 = por %p172, %p173
    %s176 = sadd.s32 %s175, 1
    %p179 = scmp.eq.s32.totalorder %s15, 1
    %p180 = scmp.ne.s32.totalorder %s175, %s177
    %p181 = scmp.eq.s32.totalorder %s15, 0
    %p182 = por %p180, %p181
    %p183 = scmp.ne.s32.totalorder %s175, %s177
    %p184 = scmp.eq.s32.totalorder %s20, 1
    %p185 = por %p183, %p184
    %p186 = scmp.ne.s32.totalorder %s177, %s178
    %p187 = scmp.eq.s32.totalorder %s20, 0
    %p188 = por %p186, %p187
    %p189 = scmp.ne.s32.totalorder %s177, %s178
    %p190 = scmp.eq.s32.totalorder %s21, 1
    %p191 = por %p189, %p190
    %p193 = scmp.ne.s32.totalorder %s178, %s192
    %p194 = scmp.eq.s32.totalorder %s21, 0
    %p195 = por %p193, %p194
    %s196 = ssub.s32 %s22, %s34
    %s197 = ssub.s32 %s23, %s30
    %s198 = sor.u32 %s196, %s197
    %p199 = scmp.eq.s32.totalorder %s198, 0
    %s201 = sadd.s32 %s200, 1
    %s202 = scalar_select %p199, %s200, %s201
    %p205 = pneg %p199
    %p206 = scmp.eq.s32.totalorder %s15, 1
    %p207 = por %p205, %p206
    %p208 = scmp.ne.s32.totalorder %s200, %s203
    %p209 = scmp.eq.s32.totalorder %s15, 0
    %p210 = por %p208, %p209
    %p211 = scmp.ne.s32.totalorder %s200, %s203
    %p212 = scmp.eq.s32.totalorder %s20, 1
    %p213 = por %p211, %p212
    %p214 = scmp.ne.s32.totalorder %s203, %s204
    %p215 = scmp.eq.s32.totalorder %s20, 0
    %p216 = por %p214, %p215
    %p217 = scmp.ne.s32.totalorder %s203, %s204
    %p218 = scmp.eq.s32.totalorder %s21, 1
    %p219 = por %p217, %p218
    %p221 = scmp.ne.s32.totalorder %s204, %s220
    %p222 = scmp.eq.s32.totalorder %s21, 0
    %p223 = por %p221, %p222
    %p224 = scmp.le.s32.totalorder 1, %s15
    %p225 = scmp.lt.s32.totalorder %s15, 3
    %p226 = pnand %p224, %p225
    %p227 = pneg %p226
    // Predicated region
    $region9: #{attention_block.1} parent=5 // pred_check
      _
    $region10: #{attention_block.1} parent=5 // pred_check_branch
      %229 = sbr.rel (%p226) target = $region12
    $region11: #{attention_block.1} parent=5 // pred_region
      %s230 = ssub.s32 %s15, 1
      // Predicated region
      $region13: #{attention_block.1} parent=11 // pred_check
        %p231 = pneg %p104
      $region14: #{attention_block.1} parent=11 // pred_check_branch
        %233 = sbr.rel (%p231) target = $region16
      $region15: #{attention_block.1} parent=11 // pred_region
        _
      $region16: #{attention_block.1} parent=11 // pred_fallthru
        _
      // Predicated region
      $region17: #{attention_block.1} parent=11 // pred_check
        %p234 = pneg %p125
      $region18: #{attention_block.1} parent=11 // pred_check_branch
        %236 = sbr.rel (%p234) target = $region20
      $region19: #{attention_block.1} parent=11 // pred_region
        _
      $region20: #{attention_block.1} parent=11 // pred_fallthru
        _
      // Predicated region
      $region21: #{attention_block.1} parent=11 // pred_check
        %p237 = pneg %p146
      $region22: #{attention_block.1} parent=11 // pred_check_branch
        %239 = sbr.rel (%p237) target = $region24
      $region23: #{attention_block.1} parent=11 // pred_region
        _
      $region24: #{attention_block.1} parent=11 // pred_fallthru
        _
      // Predicated region
      $region25: #{attention_block.1} parent=11 // pred_check
        %p240 = pneg %p167
      $region26: #{attention_block.1} parent=11 // pred_check_branch
        %242 = sbr.rel (%p240) target = $region28
      $region27: #{attention_block.1} parent=11 // pred_region
        _
      $region28: #{attention_block.1} parent=11 // pred_fallthru
        _
      // Predicated region
      $region29: #{attention_block.1} parent=11 // pred_check
        %p243 = pneg %p188
      $region30: #{attention_block.1} parent=11 // pred_check_branch
        %245 = sbr.rel (%p243) target = $region32
      $region31: #{attention_block.1} parent=11 // pred_region
        _
      $region32: #{attention_block.1} parent=11 // pred_fallthru
        _
    $region12: #{attention_block.1} parent=5 // pred_fallthru
      _
    %p246 = scmp.lt.s32.totalorder %s15, 2
    // Predicated region
    $region33: #{attention_block.1} parent=5 // pred_check
      %p247 = pneg %p246
    $region34: #{attention_block.1} parent=5 // pred_check_branch
      %249 = sbr.rel (%p247) target = $region36
    $region35: #{attention_block.1} parent=5 // pred_region
      // Predicated region
      $region37: #{attention_block.1} parent=35 // pred_check
        %p250 = pneg %p49
      $region38: #{attention_block.1} parent=35 // pred_check_branch
        %252 = sbr.rel (%p250) target = $region40
      $region39: #{attention_block.1} parent=35 // pred_region
        %s253 = smul.u32 2, %s23
        %p254 = scmp.lt.s32.totalorder %s22, 1
        %s255 = scalar_select %p254, %s22, 1
        %p256 = scmp.lt.s32.totalorder %s253, 1
        %s257 = scalar_select %p256, %s253, 1
        %s258 = smul.addr %s255, 2
        %s259 = sadd.s32 %s257, %s258
        %s260 = smul.addr %s259, 8
        %s261 = scalar_lea.vmem %s0, %s260
        %s262 = smul.u32 2, %s23
      $region40: #{attention_block.1} parent=35 // pred_fallthru
        _
      // Predicated region
      $region41: #{attention_block.1} parent=35 // pred_check
        %p263 = pneg %p77
      $region42: #{attention_block.1} parent=35 // pred_check_branch
        %265 = sbr.rel (%p263) target = $region44
      $region43: #{attention_block.1} parent=35 // pred_region
        %s266 = smul.u32 2, %s23
        %p267 = scmp.lt.s32.totalorder %s22, 1
        %s268 = scalar_select %p267, %s22, 1
        %p269 = scmp.lt.s32.totalorder %s266, 1
        %s270 = scalar_select %p269, %s266, 1
        %s271 = smul.addr %s268, 2
        %s272 = sadd.s32 %s270, %s271
        %s273 = smul.addr %s272, 8
        %s274 = scalar_lea.vmem %s1, %s273
        %s275 = smul.u32 2, %s23
      $region44: #{attention_block.1} parent=35 // pred_fallthru
        _
    $region36: #{attention_block.1} parent=5 // pred_fallthru
      _
    %p276 = scmp.le.s32.totalorder 1, %s15
    %p277 = scmp.lt.s32.totalorder %s15, 3
    %p278 = pnand %p276, %p277
    %p279 = pneg %p278
    // Predicated region
    $region45: #{attention_block.1} parent=5 // pred_check
      _
    $region46: #{attention_block.1} parent=5 // pred_check_branch
      %281 = sbr.rel (%p278) target = $region48
    $region47: #{attention_block.1} parent=5 // pred_region
      %s282 = ssub.s32 %s15, 1
      %s283 = smul.u32 2, %s25
      %p284 = scmp.lt.s32.totalorder %s24, 1
      %s285 = scalar_select %p284, %s24, 1
      %p286 = scmp.lt.s32.totalorder %s283, 1
      %s287 = scalar_select %p286, %s283, 1
      %s288 = smul.addr %s285, 2
      %s289 = sadd.s32 %s287, %s288
      %s290 = smul.addr %s289, 8
      %s291 = scalar_lea.vmem %s0, %s290
      %p292 = pneg %p55
      %p293 = pneg %p52
      %s294 = smul.u32 2, %s25
      %p295 = scmp.lt.s32.totalorder %s24, 1
      %s296 = scalar_select %p295, %s24, 1
      %p297 = scmp.lt.s32.totalorder %s294, 1
      %s298 = scalar_select %p297, %s294, 1
      %s299 = smul.addr %s296, 2
      %s300 = sadd.s32 %s298, %s299
      %s301 = smul.addr %s300, 8
      %s302 = scalar_lea.vmem %s1, %s301
      %p303 = pneg %p83
      %p304 = pneg %p80
      %p305 = pneg %p104
      %p306 = pneg %p101
      %p307 = pneg %p125
      %p308 = pneg %p122
      %p309 = pneg %p146
      %p310 = pneg %p143
      %p311 = pneg %p167
      %p312 = pneg %p164
      %p313 = pneg %p188
      %p314 = pneg %p185
      %p315 = pneg %p216
      %p316 = pneg %p213
      %s317 = smul.u32 2, %s25
      %p318 = scmp.lt.s32.totalorder %s24, 1
      %s319 = scalar_select %p318, %s24, 1
      %p320 = scmp.lt.s32.totalorder %s317, 1
      %s321 = scalar_select %p320, %s317, 1
      %s322 = smul.addr %s319, 2
      %s323 = sadd.s32 %s321, %s322
      %s324 = smul.addr %s323, 8
      %s325 = scalar_lea.vmem %s7, %s324
      %s326 = smul.u32 2, %s25
      %p327 = scmp.lt.s32.totalorder %s24, 1
      %s328 = scalar_select %p327, %s24, 1
      %p329 = scmp.lt.s32.totalorder %s326, 1
      %s330 = scalar_select %p329, %s326, 1
      %s331 = smul.addr %s328, 2
      %s332 = sadd.s32 %s330, %s331
      %s333 = smul.addr %s332, 8
      %s334 = scalar_lea.vmem %s0, %s333
      %s335 = smul.u32 2, %s25
      %s336 = smul.u32 2, %s25
      %p337 = scmp.lt.s32.totalorder %s24, 1
      %s338 = scalar_select %p337, %s24, 1
      %p339 = scmp.lt.s32.totalorder %s336, 1
      %s340 = scalar_select %p339, %s336, 1
      %s341 = smul.addr %s338, 2
      %s342 = sadd.s32 %s340, %s341
      %s343 = smul.addr %s342, 8
      %s344 = scalar_lea.vmem %s1, %s343
      %s345 = smul.u32 2, %s25
      %s346 = smul.u32 2, %s25
      %p347 = scmp.lt.s32.totalorder %s24, 1
      %s348 = scalar_select %p347, %s24, 1
      %p349 = scmp.lt.s32.totalorder %s346, 1
      %s350 = scalar_select %p349, %s346, 1
      %s351 = smul.addr %s348, 2
      %s352 = sadd.s32 %s350, %s351
      %s353 = smul.addr %s352, 8
      %s354 = scalar_lea.vmem %s7, %s353
      %s355 = smul.u32 2, %s25
      %v356 = vld [vmem:[%s334] sm:$0xff]
      %v357 = vld [vmem:[%s334 + $0x8] sm:$0xff]
      %v358 = vld [vmem:[%s344] sm:$0xff]
      %v359 = vld [vmem:[%s344 + $0x8] sm:$0xff]
      %v360 = vld [vmem:[%s2] sm:$0xf]
      %v361 = vld [vmem:[%s3] sm:$0xf]
      %vm362 = vcmask 64512
      %v364 = vsel %vm362, %v361, 0
      %366 = vmatpush.msra.mxu0 0.0
      %367 = vmatpush.msra.mxu0 0.0
      %368 = vmatpush.msra.mxu0 0.0
      %369 = vmatpush.msra.mxu0 0.0
      %370 = vmatpush.msra.mxu0 0.0
      %371 = vmatpush.msra.mxu0 0.0
      %372 = vmatpush.msra.mxu0 0.0
      %373 = vmatpush.msra.mxu0 0.0
      %374 = vmatpush.msra.mxu0 0.0
      %375 = vmatpush.msra.mxu0 0.0
      %376 = vmatpush.msra.mxu0 0.0
      %377 = vmatpush.msra.mxu0 0.0
      %378 = vmatpush.msra.mxu0 0.0
      %379 = vmatpush.msra.mxu0 0.0
      %380 = vmatpush.msra.mxu0 0.0
      %381 = vmatpush.msra.mxu0 %v358
      %382 = vmatmul.f32.gmra.mxu0 %v364
      %v383 = vpop.f32.mrf.mxu0
      %v384 = vadd.f32 0.0, %v383
      %385 = vdwg.mxu0
      %386 = vmatpush.msra.mxu0 0.0
      %387 = vmatpush.msra.mxu0 0.0
      %388 = vmatpush.msra.mxu0 0.0
      %389 = vmatpush.msra.mxu0 0.0
      %390 = vmatpush.msra.mxu0 0.0
      %391 = vmatpush.msra.mxu0 0.0
      %392 = vmatpush.msra.mxu0 0.0
      %393 = vmatpush.msra.mxu0 0.0
      %394 = vmatpush.msra.mxu0 0.0
      %395 = vmatpush.msra.mxu0 0.0
      %396 = vmatpush.msra.mxu0 0.0
      %397 = vmatpush.msra.mxu0 0.0
      %398 = vmatpush.msra.mxu0 0.0
      %399 = vmatpush.msra.mxu0 0.0
      %400 = vmatpush.msra.mxu0 0.0
      %401 = vmatpush.msra.mxu0 %v359
      %402 = vmatmul.f32.gmra.mxu0 %v364
      %v403 = vpop.f32.mrf.mxu0
      %v404 = vadd.f32 0.0, %v403
      %405 = vdwg.mxu0
      %v407 = vsel %vm362, %v360, 0
      %409 = vmatpush.msra.mxu0 0.0
      %410 = vmatpush.msra.mxu0 0.0
      %411 = vmatpush.msra.mxu0 0.0
      %412 = vmatpush.msra.mxu0 0.0
      %413 = vmatpush.msra.mxu0 0.0
      %414 = vmatpush.msra.mxu0 0.0
      %415 = vmatpush.msra.mxu0 0.0
      %416 = vmatpush.msra.mxu0 0.0
      %417 = vmatpush.msra.mxu0 0.0
      %418 = vmatpush.msra.mxu0 0.0
      %419 = vmatpush.msra.mxu0 0.0
      %420 = vmatpush.msra.mxu0 0.0
      %421 = vmatpush.msra.mxu0 0.0
      %422 = vmatpush.msra.mxu0 0.0
      %423 = vmatpush.msra.mxu0 0.0
      %424 = vmatpush.msra.mxu0 %v356
      %425 = vmatmul.f32.gmra.mxu0 %v407
      %v426 = vpop.f32.mrf.mxu0
      %v427 = vadd.f32 %v384, %v426
      %428 = vdwg.mxu0
      %429 = vmatpush.msra.mxu0 0.0
      %430 = vmatpush.msra.mxu0 0.0
      %431 = vmatpush.msra.mxu0 0.0
      %432 = vmatpush.msra.mxu0 0.0
      %433 = vmatpush.msra.mxu0 0.0
      %434 = vmatpush.msra.mxu0 0.0
      %435 = vmatpush.msra.mxu0 0.0
      %436 = vmatpush.msra.mxu0 0.0
      %437 = vmatpush.msra.mxu0 0.0
      %438 = vmatpush.msra.mxu0 0.0
      %439 = vmatpush.msra.mxu0 0.0
      %440 = vmatpush.msra.mxu0 0.0
      %441 = vmatpush.msra.mxu0 0.0
      %442 = vmatpush.msra.mxu0 0.0
      %443 = vmatpush.msra.mxu0 0.0
      %444 = vmatpush.msra.mxu0 %v357
      %445 = vmatmul.f32.gmra.mxu0 %v407
      %v446 = vpop.f32.mrf.mxu0
      %v447 = vadd.f32 %v404, %v446
      %448 = vdwg.mxu0
      %v449 = vld [vmem:[%s4] sm:$0xf]
      %451 = vset.pattern.permute.xlu0 0
      %452 = vperm.xlu0 %451, %v449
      %v453 = vpop.permute.xlu0 %452
      %v455 = vadd.f32 %v427, %v453
      %v456 = vadd.f32 %v447, %v453
      %v457 = vmax.f32 %v455, 0.0
      %v458 = vmax.f32 %v456, 0.0
      %v459 = vld [vmem:[%s5] sm:$0xf]
      %461 = vset.pattern.permute.xlu0 0
      %462 = vperm.xlu0 %461, %v459
      %v463 = vpop.permute.xlu0 %462
      %v465 = vmul.f32 %v457, %v463
      %v466 = vmul.f32 %v458, %v463
      %vm467 = vcmask 1043456
      %v468 = vsel %vm467, %v465, 0.0
      %v469 = vrot.slane %v468, 4
      %v470 = vadd.f32 %v468, %v469
      %v471 = vrot.slane %v470, 2
      %v472 = vadd.f32 %v470, %v471
      %v473 = vrot.slane %v472, 1
      %v474 = vadd.f32 %v472, %v473
      %v475 = vsel %vm467, %v466, 0.0
      %v476 = vrot.slane %v475, 4
      %v477 = vadd.f32 %v475, %v476
      %v478 = vrot.slane %v477, 2
      %v479 = vadd.f32 %v477, %v478
      %v480 = vrot.slane %v479, 1
      %v481 = vadd.f32 %v479, %v480
      %v482 = vld [vmem:[#allocation2] sm:$0x1]
      %484 = vset.pattern.permute.xlu0 0
      %485 = vperm.xlu0 %484, %v482
      %v486 = vpop.permute.xlu0 %485
      %v488 = vperm.slane %v486, 0
      %v489 = vadd.f32 %v474, %v488
      %v490 = vadd.f32 %v481, %v488
      %v491 = vxor.u32 %v489, 2147483648
      %v492 = vxor.u32 %v490, 2147483648
      %v493 = vmul.f32 %v491, 1.442695
      %v494 = vpow.pop %v493
      %v495 = vmul.f32 %v492, 1.442695
      %v496 = vpow.pop %v495
      %v497 = vadd.f32 %v494, 1.0
      %v498 = vadd.f32 %v496, 1.0
      %v499 = vrcp.pop %v497
      %v500 = vmul.f32 %v497, %v499
      %v501 = vsub.f32 1.0, %v500
      %v502 = vmul.f32 %v499, %v501
      %v503 = vadd.f32 %v499, %v502
      %vm504 = vweird.f32 %v497
      %vm505 = vweird.f32 %v499
      %vm506 = vmor %vm504, %vm505
      %v507 = vsel %vm506, %v499, %v503
      %v508 = vand.u32 2147483647, %v497
      %vm509 = vcmp.eq.f32.partialorder %v508, 8.507059e+37
      %v510 = vand.u32 %v497, 2147483648
      %v511 = vor.u32 1.1754944e-38, %v510
      %v512 = vsel %vm509, %v511, %v507
      %v513 = vmul.f32 1.0, %v512
      %v514 = vrcp.pop %v498
      %v515 = vmul.f32 %v498, %v514
      %v516 = vsub.f32 1.0, %v515
      %v517 = vmul.f32 %v514, %v516
      %v518 = vadd.f32 %v514, %v517
      %vm519 = vweird.f32 %v498
      %vm520 = vweird.f32 %v514
      %vm521 = vmor %vm519, %vm520
      %v522 = vsel %vm521, %v514, %v518
      %v523 = vand.u32 2147483647, %v498
      %vm524 = vcmp.eq.f32.partialorder %v523, 8.507059e+37
      %v525 = vand.u32 %v498, 2147483648
      %v526 = vor.u32 1.1754944e-38, %v525
      %v527 = vsel %vm524, %v526, %v522
      %v528 = vmul.f32 1.0, %v527
      %v529 = vmul.f32 %v513, %v358
      %v530 = vmul.f32 %v528, %v359
      %531 = vst [vmem:[%s354] sm:$0xff] %v529
      %532 = vst [vmem:[%s354 + $0x8] sm:$0xff] %v530
      %s533 = smul.u32 2, %s25
      %p534 = scmp.lt.s32.totalorder %s24, 1
      %s535 = scalar_select %p534, %s24, 1
      %p536 = scmp.lt.s32.totalorder %s533, 1
      %s537 = scalar_select %p536, %s533, 1
      %s538 = smul.addr %s535, 2
      %s539 = sadd.s32 %s537, %s538
      %s540 = smul.addr %s539, 8
      %s541 = scalar_lea.vmem %s7, %s540
      // Predicated region
      $region49: #{attention_block.1} parent=47 // pred_check
        %p542 = pneg %p213
      $region50: #{attention_block.1} parent=47 // pred_check_branch
        %544 = sbr.rel (%p542) target = $region52
      $region51: #{attention_block.1} parent=47 // pred_region
        %s545 = smul.u32 2, %s25
      $region52: #{attention_block.1} parent=47 // pred_fallthru
        _
    $region48: #{attention_block.1} parent=5 // pred_fallthru
      _
    %p546 = scmp.le.s32.totalorder 2, %s15
    // Predicated region
    $region53: #{attention_block.1} parent=5 // pred_check
      %p547 = pneg %p546
    $region54: #{attention_block.1} parent=5 // pred_check_branch
      %549 = sbr.rel (%p547) target = $region56
    $region55: #{attention_block.1} parent=5 // pred_region
      %s550 = ssub.s32 %s15, 2
      // Predicated region
      $region57: #{attention_block.1} parent=55 // pred_check
        %p551 = pneg %p219
      $region58: #{attention_block.1} parent=55 // pred_check_branch
        %553 = sbr.rel (%p551) target = $region60
      $region59: #{attention_block.1} parent=55 // pred_region
        %s554 = smul.u32 2, %s27
        %p555 = scmp.lt.s32.totalorder %s26, 1
        %s556 = scalar_select %p555, %s26, 1
        %p557 = scmp.lt.s32.totalorder %s554, 1
        %s558 = scalar_select %p557, %s554, 1
        %s559 = smul.addr %s556, 2
        %s560 = sadd.s32 %s558, %s559
        %s561 = smul.addr %s560, 8
        %s562 = scalar_lea.vmem %s7, %s561
      $region60: #{attention_block.1} parent=55 // pred_fallthru
        _
    $region56: #{attention_block.1} parent=5 // pred_fallthru
      _
  $region6: #{attention_block.1} parent=0 // loop_footer
    %s19 = sadd.s32 1, %s15
  $region7: #{attention_block.1} parent=0 // loop_footer_branch
    %14 = sbr.rel target = $region3
  $region8: #{attention_block.1} parent=0 // loop_exit
    _

</llo_original>
